<compile_context>
chip_gen: v6e
topology: v6e:2x2x1
jax: 0.10.0
libtpu: 0.0.40
codegen_flags: <defaults>
</compile_context>

<pallas_src>
import jax
import jax.numpy as jnp
import numpy as np
from jax.experimental import pallas as pl
from jax.experimental.pallas import tpu as pltpu


def hnn_quad_kernel(w_ref, x_ref, o_ref):
    """w_ref: SMEM f32[D + D^2 + D^3 + 1] flat weight table
         [0:D]            -> w1[j]                (linear)
         [D:D+D^2]        -> W2[j*D + k]          (quadratic, kron(x,x) order)
         [D+D^2:-1]       -> W3[i*D^2 + j*D + k]  (cubic, kron(x,kron(x,x)) order)
         [-1]             -> bias
       x_ref: VMEM (D, TB)  -- batch on the lane axis
       o_ref: VMEM (1, TB)  -- lane-dense output
    """
    x = x_ref[...].astype(jnp.float32)            # (D, TB)
    D = x.shape[0]
    off2 = D
    off3 = D + D * D
    bias_idx = D + D * D + D * D * D

    # Rows of x as (1, TB) lane vectors (static slices -> no copies).
    xr = [x[i:i + 1, :] for i in range(D)]

    # Linear term:  h = sum_j w1[j] * x_j            (scalar-broadcast FMAs)
    h = w_ref[0] * xr[0]
    for j in range(1, D):
        h = h + w_ref[j] * xr[j]

    # Quadratic + cubic terms, factored as
    #   h += (W2[j,k] + sum_i W3[i,j,k] * x_i) * (x_j * x_k)
    # NOTE: D is tiny (4) so the Python unroll is fine; for D >= ~16 switch to a
    # fused matmul / fori_loop form to bound vreg live ranges.
    for j in range(D):
        for k in range(D):
            p = xr[j] * xr[k]                                       # (1, TB)
            coeff = w_ref[off3 + 0 * D * D + j * D + k] * xr[0]
            for i in range(1, D):
                coeff = coeff + w_ref[off3 + i * D * D + j * D + k] * xr[i]
            h = h + (w_ref[off2 + j * D + k] + coeff) * p

    o_ref[...] = (h + w_ref[bias_idx]).astype(o_ref.dtype)


def hnn_quad_forward(x, fc_weight, fc_bias):
    """x: (B, D) float32; fc_weight: (1, D^3+D^2+D); fc_bias: (1,). Returns (B, 1)."""
    B, D = x.shape
    n_feat = D + D * D + D * D * D

    # Glue: one flat scalar table [w1 | W2 | W3 | bias].  fc_weight columns are
    # already ordered as [x | kron(x,x) | kron(x,kron(x,x))], which matches the
    # flat indexing used in the kernel.
    w_all = jnp.concatenate(
        [fc_weight[0, :n_feat], fc_bias.reshape(1)]).astype(jnp.float32)

    # Layout plumbing: batch on the lane (last) axis.
    x_t = x.T                                      # (D, B)

    # Lane-dense batch tile: largest multiple of 128 dividing B, else whole B.
    TB = B
    for cand in (2048, 1024, 512, 256, 128):
        if B % cand == 0:
            TB = cand
            break
    grid = (B // TB,)

    out = pl.pallas_call(
        hnn_quad_kernel,
        out_shape=jax.ShapeDtypeStruct((1, B), x.dtype),
        grid=grid,
        in_specs=[
            # All weights as SMEM scalars (untiled): no padded VMEM weight tiles.
            pl.BlockSpec(memory_space=pltpu.MemorySpace.SMEM),
            # x^T with batch on lanes.
            pl.BlockSpec((D, TB), lambda i: (0, i)),
        ],
        # Lane-dense output tile.
        out_specs=pl.BlockSpec((1, TB), lambda i: (0, i)),
        compiler_params=pltpu.CompilerParams(
            dimension_semantics=("parallel",)),
    )(w_all, x_t)

    return out.reshape(B, 1)


def hnn_quad_reference(x, fc_weight, fc_bias):
    """Pure-JAX reference mirroring the PyTorch forward exactly."""
    B, D = x.shape
    x2 = (x[:, :, None] * x[:, None, :]).reshape(B, D * D)          # kron(x, x)
    x3 = (x[:, :, None] * x2[:, None, :]).reshape(B, D * D * D)     # kron(x, x2)
    x_all = jnp.concatenate((x, x2, x3), axis=-1)
    return x_all @ fc_weight.T + fc_bias


if __name__ == "__main__":
    dim = 4          # latent dimension (even, for the symplectic J; J unused in forward)
    batch = 8
    feat = dim ** 3 + dim ** 2 + dim

    key = jax.random.PRNGKey(0)
    kx, kw, kb = jax.random.split(key, 3)

    x = jax.random.normal(kx, (batch, dim), dtype=jnp.float32)

    # Deterministic nn.Linear-style init: U(-1/sqrt(fan_in), 1/sqrt(fan_in))
    bound = 1.0 / np.sqrt(feat)
    fc_weight = jax.random.uniform(kw, (1, feat), dtype=jnp.float32,
                                   minval=-bound, maxval=bound)
    fc_bias = jax.random.uniform(kb, (1,), dtype=jnp.float32,
                                 minval=-bound, maxval=bound)

    out = hnn_quad_forward(x, fc_weight, fc_bias)
    out = jax.block_until_ready(out)

    ref = hnn_quad_reference(x, fc_weight, fc_bias)
    assert out.shape == (batch, 1)
    np.testing.assert_allclose(np.asarray(out), np.asarray(ref),
                               rtol=1e-5, atol=1e-5)

    # TODO(synk): vector_field / vector_field_jacobian rely on torch.autograd;
    # they are analytic gradients of this forward and were not ported.
    print("KERNEL_OK")
</pallas_src>

<mosaic_0001>
module attributes {stable_mosaic.version = 11 : i64} {
  func.func @hnn_quad_kernel(%arg0: i32, %arg1: memref<85xf32, #tpu.memory_space<smem>>, %arg2: memref<4x8xf32, #tpu.memory_space<vmem>>, %arg3: memref<1x8xf32, #tpu.memory_space<vmem>>) attributes {dimension_semantics = [#tpu.dimension_semantics<parallel>], iteration_bounds = array<i64: 1>, scalar_prefetch = 0 : i64, scratch_operands = 0 : i64, tpu.core_type = #tpu.core_type<tc>, window_params = [{transform_indices = @transform_0, window_bounds = array<i64: 85>}, {transform_indices = @transform_1, window_bounds = array<i64: 4, 8>}, {transform_indices = @transform_2, window_bounds = array<i64: 1, 8>}]} {
    %c0 = arith.constant 0 : index
    %c0_0 = arith.constant 0 : index
    %0 = vector.load %arg2[%c0, %c0_0] : memref<4x8xf32, #tpu.memory_space<vmem>>, vector<4x8xf32>
    %1 = vector.extract_strided_slice %0 {offsets = [0, 0], sizes = [1, 8], strides = [1, 1]} : vector<4x8xf32> to vector<1x8xf32>
    %2 = vector.extract_strided_slice %0 {offsets = [1, 0], sizes = [1, 8], strides = [1, 1]} : vector<4x8xf32> to vector<1x8xf32>
    %3 = vector.extract_strided_slice %0 {offsets = [2, 0], sizes = [1, 8], strides = [1, 1]} : vector<4x8xf32> to vector<1x8xf32>
    %4 = vector.extract_strided_slice %0 {offsets = [3, 0], sizes = [1, 8], strides = [1, 1]} : vector<4x8xf32> to vector<1x8xf32>
    %c0_1 = arith.constant 0 : index
    %5 = memref.load %arg1[%c0_1] : memref<85xf32, #tpu.memory_space<smem>>
    %6 = vector.broadcast %5 : f32 to vector<1x8xf32>
    %7 = arith.mulf %6, %1 : vector<1x8xf32>
    %c1 = arith.constant 1 : index
    %8 = memref.load %arg1[%c1] : memref<85xf32, #tpu.memory_space<smem>>
    %9 = vector.broadcast %8 : f32 to vector<1x8xf32>
    %10 = arith.mulf %9, %2 : vector<1x8xf32>
    %11 = arith.addf %7, %10 : vector<1x8xf32>
    %c2 = arith.constant 2 : index
    %12 = memref.load %arg1[%c2] : memref<85xf32, #tpu.memory_space<smem>>
    %13 = vector.broadcast %12 : f32 to vector<1x8xf32>
    %14 = arith.mulf %13, %3 : vector<1x8xf32>
    %15 = arith.addf %11, %14 : vector<1x8xf32>
    %c3 = arith.constant 3 : index
    %16 = memref.load %arg1[%c3] : memref<85xf32, #tpu.memory_space<smem>>
    %17 = vector.broadcast %16 : f32 to vector<1x8xf32>
    %18 = arith.mulf %17, %4 : vector<1x8xf32>
    %19 = arith.addf %15, %18 : vector<1x8xf32>
    %20 = arith.mulf %1, %1 : vector<1x8xf32>
    %c20 = arith.constant 20 : index
    %21 = memref.load %arg1[%c20] : memref<85xf32, #tpu.memory_space<smem>>
    %22 = vector.broadcast %21 : f32 to vector<1x8xf32>
    %23 = arith.mulf %22, %1 : vector<1x8xf32>
    %c36 = arith.constant 36 : index
    %24 = memref.load %arg1[%c36] : memref<85xf32, #tpu.memory_space<smem>>
    %25 = vector.broadcast %24 : f32 to vector<1x8xf32>
    %26 = arith.mulf %25, %2 : vector<1x8xf32>
    %27 = arith.addf %23, %26 : vector<1x8xf32>
    %c52 = arith.constant 52 : index
    %28 = memref.load %arg1[%c52] : memref<85xf32, #tpu.memory_space<smem>>
    %29 = vector.broadcast %28 : f32 to vector<1x8xf32>
    %30 = arith.mulf %29, %3 : vector<1x8xf32>
    %31 = arith.addf %27, %30 : vector<1x8xf32>
    %c68 = arith.constant 68 : index
    %32 = memref.load %arg1[%c68] : memref<85xf32, #tpu.memory_space<smem>>
    %33 = vector.broadcast %32 : f32 to vector<1x8xf32>
    %34 = arith.mulf %33, %4 : vector<1x8xf32>
    %35 = arith.addf %31, %34 : vector<1x8xf32>
    %c4 = arith.constant 4 : index
    %36 = memref.load %arg1[%c4] : memref<85xf32, #tpu.memory_space<smem>>
    %37 = vector.broadcast %36 : f32 to vector<1x8xf32>
    %38 = arith.addf %37, %35 : vector<1x8xf32>
    %39 = arith.mulf %38, %20 : vector<1x8xf32>
    %40 = arith.addf %19, %39 : vector<1x8xf32>
    %41 = arith.mulf %1, %2 : vector<1x8xf32>
    %c21 = arith.constant 21 : index
    %42 = memref.load %arg1[%c21] : memref<85xf32, #tpu.memory_space<smem>>
    %43 = vector.broadcast %42 : f32 to vector<1x8xf32>
    %44 = arith.mulf %43, %1 : vector<1x8xf32>
    %c37 = arith.constant 37 : index
    %45 = memref.load %arg1[%c37] : memref<85xf32, #tpu.memory_space<smem>>
    %46 = vector.broadcast %45 : f32 to vector<1x8xf32>
    %47 = arith.mulf %46, %2 : vector<1x8xf32>
    %48 = arith.addf %44, %47 : vector<1x8xf32>
    %c53 = arith.constant 53 : index
    %49 = memref.load %arg1[%c53] : memref<85xf32, #tpu.memory_space<smem>>
    %50 = vector.broadcast %49 : f32 to vector<1x8xf32>
    %51 = arith.mulf %50, %3 : vector<1x8xf32>
    %52 = arith.addf %48, %51 : vector<1x8xf32>
    %c69 = arith.constant 69 : index
    %53 = memref.load %arg1[%c69] : memref<85xf32, #tpu.memory_space<smem>>
    %54 = vector.broadcast %53 : f32 to vector<1x8xf32>
    %55 = arith.mulf %54, %4 : vector<1x8xf32>
    %56 = arith.addf %52, %55 : vector<1x8xf32>
    %c5 = arith.constant 5 : index
    %57 = memref.load %arg1[%c5] : memref<85xf32, #tpu.memory_space<smem>>
    %58 = vector.broadcast %57 : f32 to vector<1x8xf32>
    %59 = arith.addf %58, %56 : vector<1x8xf32>
    %60 = arith.mulf %59, %41 : vector<1x8xf32>
    %61 = arith.addf %40, %60 : vector<1x8xf32>
    %62 = arith.mulf %1, %3 : vector<1x8xf32>
    %c22 = arith.constant 22 : index
    %63 = memref.load %arg1[%c22] : memref<85xf32, #tpu.memory_space<smem>>
    %64 = vector.broadcast %63 : f32 to vector<1x8xf32>
    %65 = arith.mulf %64, %1 : vector<1x8xf32>
    %c38 = arith.constant 38 : index
    %66 = memref.load %arg1[%c38] : memref<85xf32, #tpu.memory_space<smem>>
    %67 = vector.broadcast %66 : f32 to vector<1x8xf32>
    %68 = arith.mulf %67, %2 : vector<1x8xf32>
    %69 = arith.addf %65, %68 : vector<1x8xf32>
    %c54 = arith.constant 54 : index
    %70 = memref.load %arg1[%c54] : memref<85xf32, #tpu.memory_space<smem>>
    %71 = vector.broadcast %70 : f32 to vector<1x8xf32>
    %72 = arith.mulf %71, %3 : vector<1x8xf32>
    %73 = arith.addf %69, %72 : vector<1x8xf32>
    %c70 = arith.constant 70 : index
    %74 = memref.load %arg1[%c70] : memref<85xf32, #tpu.memory_space<smem>>
    %75 = vector.broadcast %74 : f32 to vector<1x8xf32>
    %76 = arith.mulf %75, %4 : vector<1x8xf32>
    %77 = arith.addf %73, %76 : vector<1x8xf32>
    %c6 = arith.constant 6 : index
    %78 = memref.load %arg1[%c6] : memref<85xf32, #tpu.memory_space<smem>>
    %79 = vector.broadcast %78 : f32 to vector<1x8xf32>
    %80 = arith.addf %79, %77 : vector<1x8xf32>
    %81 = arith.mulf %80, %62 : vector<1x8xf32>
    %82 = arith.addf %61, %81 : vector<1x8xf32>
    %83 = arith.mulf %1, %4 : vector<1x8xf32>
    %c23 = arith.constant 23 : index
    %84 = memref.load %arg1[%c23] : memref<85xf32, #tpu.memory_space<smem>>
    %85 = vector.broadcast %84 : f32 to vector<1x8xf32>
    %86 = arith.mulf %85, %1 : vector<1x8xf32>
    %c39 = arith.constant 39 : index
    %87 = memref.load %arg1[%c39] : memref<85xf32, #tpu.memory_space<smem>>
    %88 = vector.broadcast %87 : f32 to vector<1x8xf32>
    %89 = arith.mulf %88, %2 : vector<1x8xf32>
    %90 = arith.addf %86, %89 : vector<1x8xf32>
    %c55 = arith.constant 55 : index
    %91 = memref.load %arg1[%c55] : memref<85xf32, #tpu.memory_space<smem>>
    %92 = vector.broadcast %91 : f32 to vector<1x8xf32>
    %93 = arith.mulf %92, %3 : vector<1x8xf32>
    %94 = arith.addf %90, %93 : vector<1x8xf32>
    %c71 = arith.constant 71 : index
    %95 = memref.load %arg1[%c71] : memref<85xf32, #tpu.memory_space<smem>>
    %96 = vector.broadcast %95 : f32 to vector<1x8xf32>
    %97 = arith.mulf %96, %4 : vector<1x8xf32>
    %98 = arith.addf %94, %97 : vector<1x8xf32>
    %c7 = arith.constant 7 : index
    %99 = memref.load %arg1[%c7] : memref<85xf32, #tpu.memory_space<smem>>
    %100 = vector.broadcast %99 : f32 to vector<1x8xf32>
    %101 = arith.addf %100, %98 : vector<1x8xf32>
    %102 = arith.mulf %101, %83 : vector<1x8xf32>
    %103 = arith.addf %82, %102 : vector<1x8xf32>
    %104 = arith.mulf %2, %1 : vector<1x8xf32>
    %c24 = arith.constant 24 : index
    %105 = memref.load %arg1[%c24] : memref<85xf32, #tpu.memory_space<smem>>
    %106 = vector.broadcast %105 : f32 to vector<1x8xf32>
    %107 = arith.mulf %106, %1 : vector<1x8xf32>
    %c40 = arith.constant 40 : index
    %108 = memref.load %arg1[%c40] : memref<85xf32, #tpu.memory_space<smem>>
    %109 = vector.broadcast %108 : f32 to vector<1x8xf32>
    %110 = arith.mulf %109, %2 : vector<1x8xf32>
    %111 = arith.addf %107, %110 : vector<1x8xf32>
    %c56 = arith.constant 56 : index
    %112 = memref.load %arg1[%c56] : memref<85xf32, #tpu.memory_space<smem>>
    %113 = vector.broadcast %112 : f32 to vector<1x8xf32>
    %114 = arith.mulf %113, %3 : vector<1x8xf32>
    %115 = arith.addf %111, %114 : vector<1x8xf32>
    %c72 = arith.constant 72 : index
    %116 = memref.load %arg1[%c72] : memref<85xf32, #tpu.memory_space<smem>>
    %117 = vector.broadcast %116 : f32 to vector<1x8xf32>
    %118 = arith.mulf %117, %4 : vector<1x8xf32>
    %119 = arith.addf %115, %118 : vector<1x8xf32>
    %c8 = arith.constant 8 : index
    %120 = memref.load %arg1[%c8] : memref<85xf32, #tpu.memory_space<smem>>
    %121 = vector.broadcast %120 : f32 to vector<1x8xf32>
    %122 = arith.addf %121, %119 : vector<1x8xf32>
    %123 = arith.mulf %122, %104 : vector<1x8xf32>
    %124 = arith.addf %103, %123 : vector<1x8xf32>
    %125 = arith.mulf %2, %2 : vector<1x8xf32>
    %c25 = arith.constant 25 : index
    %126 = memref.load %arg1[%c25] : memref<85xf32, #tpu.memory_space<smem>>
    %127 = vector.broadcast %126 : f32 to vector<1x8xf32>
    %128 = arith.mulf %127, %1 : vector<1x8xf32>
    %c41 = arith.constant 41 : index
    %129 = memref.load %arg1[%c41] : memref<85xf32, #tpu.memory_space<smem>>
    %130 = vector.broadcast %129 : f32 to vector<1x8xf32>
    %131 = arith.mulf %130, %2 : vector<1x8xf32>
    %132 = arith.addf %128, %131 : vector<1x8xf32>
    %c57 = arith.constant 57 : index
    %133 = memref.load %arg1[%c57] : memref<85xf32, #tpu.memory_space<smem>>
    %134 = vector.broadcast %133 : f32 to vector<1x8xf32>
    %135 = arith.mulf %134, %3 : vector<1x8xf32>
    %136 = arith.addf %132, %135 : vector<1x8xf32>
    %c73 = arith.constant 73 : index
    %137 = memref.load %arg1[%c73] : memref<85xf32, #tpu.memory_space<smem>>
    %138 = vector.broadcast %137 : f32 to vector<1x8xf32>
    %139 = arith.mulf %138, %4 : vector<1x8xf32>
    %140 = arith.addf %136, %139 : vector<1x8xf32>
    %c9 = arith.constant 9 : index
    %141 = memref.load %arg1[%c9] : memref<85xf32, #tpu.memory_space<smem>>
    %142 = vector.broadcast %141 : f32 to vector<1x8xf32>
    %143 = arith.addf %142, %140 : vector<1x8xf32>
    %144 = arith.mulf %143, %125 : vector<1x8xf32>
    %145 = arith.addf %124, %144 : vector<1x8xf32>
    %146 = arith.mulf %2, %3 : vector<1x8xf32>
    %c26 = arith.constant 26 : index
    %147 = memref.load %arg1[%c26] : memref<85xf32, #tpu.memory_space<smem>>
    %148 = vector.broadcast %147 : f32 to vector<1x8xf32>
    %149 = arith.mulf %148, %1 : vector<1x8xf32>
    %c42 = arith.constant 42 : index
    %150 = memref.load %arg1[%c42] : memref<85xf32, #tpu.memory_space<smem>>
    %151 = vector.broadcast %150 : f32 to vector<1x8xf32>
    %152 = arith.mulf %151, %2 : vector<1x8xf32>
    %153 = arith.addf %149, %152 : vector<1x8xf32>
    %c58 = arith.constant 58 : index
    %154 = memref.load %arg1[%c58] : memref<85xf32, #tpu.memory_space<smem>>
    %155 = vector.broadcast %154 : f32 to vector<1x8xf32>
    %156 = arith.mulf %155, %3 : vector<1x8xf32>
    %157 = arith.addf %153, %156 : vector<1x8xf32>
    %c74 = arith.constant 74 : index
    %158 = memref.load %arg1[%c74] : memref<85xf32, #tpu.memory_space<smem>>
    %159 = vector.broadcast %158 : f32 to vector<1x8xf32>
    %160 = arith.mulf %159, %4 : vector<1x8xf32>
    %161 = arith.addf %157, %160 : vector<1x8xf32>
    %c10 = arith.constant 10 : index
    %162 = memref.load %arg1[%c10] : memref<85xf32, #tpu.memory_space<smem>>
    %163 = vector.broadcast %162 : f32 to vector<1x8xf32>
    %164 = arith.addf %163, %161 : vector<1x8xf32>
    %165 = arith.mulf %164, %146 : vector<1x8xf32>
    %166 = arith.addf %145, %165 : vector<1x8xf32>
    %167 = arith.mulf %2, %4 : vector<1x8xf32>
    %c27 = arith.constant 27 : index
    %168 = memref.load %arg1[%c27] : memref<85xf32, #tpu.memory_space<smem>>
    %169 = vector.broadcast %168 : f32 to vector<1x8xf32>
    %170 = arith.mulf %169, %1 : vector<1x8xf32>
    %c43 = arith.constant 43 : index
    %171 = memref.load %arg1[%c43] : memref<85xf32, #tpu.memory_space<smem>>
    %172 = vector.broadcast %171 : f32 to vector<1x8xf32>
    %173 = arith.mulf %172, %2 : vector<1x8xf32>
    %174 = arith.addf %170, %173 : vector<1x8xf32>
    %c59 = arith.constant 59 : index
    %175 = memref.load %arg1[%c59] : memref<85xf32, #tpu.memory_space<smem>>
    %176 = vector.broadcast %175 : f32 to vector<1x8xf32>
    %177 = arith.mulf %176, %3 : vector<1x8xf32>
    %178 = arith.addf %174, %177 : vector<1x8xf32>
    %c75 = arith.constant 75 : index
    %179 = memref.load %arg1[%c75] : memref<85xf32, #tpu.memory_space<smem>>
    %180 = vector.broadcast %179 : f32 to vector<1x8xf32>
    %181 = arith.mulf %180, %4 : vector<1x8xf32>
    %182 = arith.addf %178, %181 : vector<1x8xf32>
    %c11 = arith.constant 11 : index
    %183 = memref.load %arg1[%c11] : memref<85xf32, #tpu.memory_space<smem>>
    %184 = vector.broadcast %183 : f32 to vector<1x8xf32>
    %185 = arith.addf %184, %182 : vector<1x8xf32>
    %186 = arith.mulf %185, %167 : vector<1x8xf32>
    %187 = arith.addf %166, %186 : vector<1x8xf32>
    %188 = arith.mulf %3, %1 : vector<1x8xf32>
    %c28 = arith.constant 28 : index
    %189 = memref.load %arg1[%c28] : memref<85xf32, #tpu.memory_space<smem>>
    %190 = vector.broadcast %189 : f32 to vector<1x8xf32>
    %191 = arith.mulf %190, %1 : vector<1x8xf32>
    %c44 = arith.constant 44 : index
    %192 = memref.load %arg1[%c44] : memref<85xf32, #tpu.memory_space<smem>>
    %193 = vector.broadcast %192 : f32 to vector<1x8xf32>
    %194 = arith.mulf %193, %2 : vector<1x8xf32>
    %195 = arith.addf %191, %194 : vector<1x8xf32>
    %c60 = arith.constant 60 : index
    %196 = memref.load %arg1[%c60] : memref<85xf32, #tpu.memory_space<smem>>
    %197 = vector.broadcast %196 : f32 to vector<1x8xf32>
    %198 = arith.mulf %197, %3 : vector<1x8xf32>
    %199 = arith.addf %195, %198 : vector<1x8xf32>
    %c76 = arith.constant 76 : index
    %200 = memref.load %arg1[%c76] : memref<85xf32, #tpu.memory_space<smem>>
    %201 = vector.broadcast %200 : f32 to vector<1x8xf32>
    %202 = arith.mulf %201, %4 : vector<1x8xf32>
    %203 = arith.addf %199, %202 : vector<1x8xf32>
    %c12 = arith.constant 12 : index
    %204 = memref.load %arg1[%c12] : memref<85xf32, #tpu.memory_space<smem>>
    %205 = vector.broadcast %204 : f32 to vector<1x8xf32>
    %206 = arith.addf %205, %203 : vector<1x8xf32>
    %207 = arith.mulf %206, %188 : vector<1x8xf32>
    %208 = arith.addf %187, %207 : vector<1x8xf32>
    %209 = arith.mulf %3, %2 : vector<1x8xf32>
    %c29 = arith.constant 29 : index
    %210 = memref.load %arg1[%c29] : memref<85xf32, #tpu.memory_space<smem>>
    %211 = vector.broadcast %210 : f32 to vector<1x8xf32>
    %212 = arith.mulf %211, %1 : vector<1x8xf32>
    %c45 = arith.constant 45 : index
    %213 = memref.load %arg1[%c45] : memref<85xf32, #tpu.memory_space<smem>>
    %214 = vector.broadcast %213 : f32 to vector<1x8xf32>
    %215 = arith.mulf %214, %2 : vector<1x8xf32>
    %216 = arith.addf %212, %215 : vector<1x8xf32>
    %c61 = arith.constant 61 : index
    %217 = memref.load %arg1[%c61] : memref<85xf32, #tpu.memory_space<smem>>
    %218 = vector.broadcast %217 : f32 to vector<1x8xf32>
    %219 = arith.mulf %218, %3 : vector<1x8xf32>
    %220 = arith.addf %216, %219 : vector<1x8xf32>
    %c77 = arith.constant 77 : index
    %221 = memref.load %arg1[%c77] : memref<85xf32, #tpu.memory_space<smem>>
    %222 = vector.broadcast %221 : f32 to vector<1x8xf32>
    %223 = arith.mulf %222, %4 : vector<1x8xf32>
    %224 = arith.addf %220, %223 : vector<1x8xf32>
    %c13 = arith.constant 13 : index
    %225 = memref.load %arg1[%c13] : memref<85xf32, #tpu.memory_space<smem>>
    %226 = vector.broadcast %225 : f32 to vector<1x8xf32>
    %227 = arith.addf %226, %224 : vector<1x8xf32>
    %228 = arith.mulf %227, %209 : vector<1x8xf32>
    %229 = arith.addf %208, %228 : vector<1x8xf32>
    %230 = arith.mulf %3, %3 : vector<1x8xf32>
    %c30 = arith.constant 30 : index
    %231 = memref.load %arg1[%c30] : memref<85xf32, #tpu.memory_space<smem>>
    %232 = vector.broadcast %231 : f32 to vector<1x8xf32>
    %233 = arith.mulf %232, %1 : vector<1x8xf32>
    %c46 = arith.constant 46 : index
    %234 = memref.load %arg1[%c46] : memref<85xf32, #tpu.memory_space<smem>>
    %235 = vector.broadcast %234 : f32 to vector<1x8xf32>
    %236 = arith.mulf %235, %2 : vector<1x8xf32>
    %237 = arith.addf %233, %236 : vector<1x8xf32>
    %c62 = arith.constant 62 : index
    %238 = memref.load %arg1[%c62] : memref<85xf32, #tpu.memory_space<smem>>
    %239 = vector.broadcast %238 : f32 to vector<1x8xf32>
    %240 = arith.mulf %239, %3 : vector<1x8xf32>
    %241 = arith.addf %237, %240 : vector<1x8xf32>
    %c78 = arith.constant 78 : index
    %242 = memref.load %arg1[%c78] : memref<85xf32, #tpu.memory_space<smem>>
    %243 = vector.broadcast %242 : f32 to vector<1x8xf32>
    %244 = arith.mulf %243, %4 : vector<1x8xf32>
    %245 = arith.addf %241, %244 : vector<1x8xf32>
    %c14 = arith.constant 14 : index
    %246 = memref.load %arg1[%c14] : memref<85xf32, #tpu.memory_space<smem>>
    %247 = vector.broadcast %246 : f32 to vector<1x8xf32>
    %248 = arith.addf %247, %245 : vector<1x8xf32>
    %249 = arith.mulf %248, %230 : vector<1x8xf32>
    %250 = arith.addf %229, %249 : vector<1x8xf32>
    %251 = arith.mulf %3, %4 : vector<1x8xf32>
    %c31 = arith.constant 31 : index
    %252 = memref.load %arg1[%c31] : memref<85xf32, #tpu.memory_space<smem>>
    %253 = vector.broadcast %252 : f32 to vector<1x8xf32>
    %254 = arith.mulf %253, %1 : vector<1x8xf32>
    %c47 = arith.constant 47 : index
    %255 = memref.load %arg1[%c47] : memref<85xf32, #tpu.memory_space<smem>>
    %256 = vector.broadcast %255 : f32 to vector<1x8xf32>
    %257 = arith.mulf %256, %2 : vector<1x8xf32>
    %258 = arith.addf %254, %257 : vector<1x8xf32>
    %c63 = arith.constant 63 : index
    %259 = memref.load %arg1[%c63] : memref<85xf32, #tpu.memory_space<smem>>
    %260 = vector.broadcast %259 : f32 to vector<1x8xf32>
    %261 = arith.mulf %260, %3 : vector<1x8xf32>
    %262 = arith.addf %258, %261 : vector<1x8xf32>
    %c79 = arith.constant 79 : index
    %263 = memref.load %arg1[%c79] : memref<85xf32, #tpu.memory_space<smem>>
    %264 = vector.broadcast %263 : f32 to vector<1x8xf32>
    %265 = arith.mulf %264, %4 : vector<1x8xf32>
    %266 = arith.addf %262, %265 : vector<1x8xf32>
    %c15 = arith.constant 15 : index
    %267 = memref.load %arg1[%c15] : memref<85xf32, #tpu.memory_space<smem>>
    %268 = vector.broadcast %267 : f32 to vector<1x8xf32>
    %269 = arith.addf %268, %266 : vector<1x8xf32>
    %270 = arith.mulf %269, %251 : vector<1x8xf32>
    %271 = arith.addf %250, %270 : vector<1x8xf32>
    %272 = arith.mulf %4, %1 : vector<1x8xf32>
    %c32 = arith.constant 32 : index
    %273 = memref.load %arg1[%c32] : memref<85xf32, #tpu.memory_space<smem>>
    %274 = vector.broadcast %273 : f32 to vector<1x8xf32>
    %275 = arith.mulf %274, %1 : vector<1x8xf32>
    %c48 = arith.constant 48 : index
    %276 = memref.load %arg1[%c48] : memref<85xf32, #tpu.memory_space<smem>>
    %277 = vector.broadcast %276 : f32 to vector<1x8xf32>
    %278 = arith.mulf %277, %2 : vector<1x8xf32>
    %279 = arith.addf %275, %278 : vector<1x8xf32>
    %c64 = arith.constant 64 : index
    %280 = memref.load %arg1[%c64] : memref<85xf32, #tpu.memory_space<smem>>
    %281 = vector.broadcast %280 : f32 to vector<1x8xf32>
    %282 = arith.mulf %281, %3 : vector<1x8xf32>
    %283 = arith.addf %279, %282 : vector<1x8xf32>
    %c80 = arith.constant 80 : index
    %284 = memref.load %arg1[%c80] : memref<85xf32, #tpu.memory_space<smem>>
    %285 = vector.broadcast %284 : f32 to vector<1x8xf32>
    %286 = arith.mulf %285, %4 : vector<1x8xf32>
    %287 = arith.addf %283, %286 : vector<1x8xf32>
    %c16 = arith.constant 16 : index
    %288 = memref.load %arg1[%c16] : memref<85xf32, #tpu.memory_space<smem>>
    %289 = vector.broadcast %288 : f32 to vector<1x8xf32>
    %290 = arith.addf %289, %287 : vector<1x8xf32>
    %291 = arith.mulf %290, %272 : vector<1x8xf32>
    %292 = arith.addf %271, %291 : vector<1x8xf32>
    %293 = arith.mulf %4, %2 : vector<1x8xf32>
    %c33 = arith.constant 33 : index
    %294 = memref.load %arg1[%c33] : memref<85xf32, #tpu.memory_space<smem>>
    %295 = vector.broadcast %294 : f32 to vector<1x8xf32>
    %296 = arith.mulf %295, %1 : vector<1x8xf32>
    %c49 = arith.constant 49 : index
    %297 = memref.load %arg1[%c49] : memref<85xf32, #tpu.memory_space<smem>>
    %298 = vector.broadcast %297 : f32 to vector<1x8xf32>
    %299 = arith.mulf %298, %2 : vector<1x8xf32>
    %300 = arith.addf %296, %299 : vector<1x8xf32>
    %c65 = arith.constant 65 : index
    %301 = memref.load %arg1[%c65] : memref<85xf32, #tpu.memory_space<smem>>
    %302 = vector.broadcast %301 : f32 to vector<1x8xf32>
    %303 = arith.mulf %302, %3 : vector<1x8xf32>
    %304 = arith.addf %300, %303 : vector<1x8xf32>
    %c81 = arith.constant 81 : index
    %305 = memref.load %arg1[%c81] : memref<85xf32, #tpu.memory_space<smem>>
    %306 = vector.broadcast %305 : f32 to vector<1x8xf32>
    %307 = arith.mulf %306, %4 : vector<1x8xf32>
    %308 = arith.addf %304, %307 : vector<1x8xf32>
    %c17 = arith.constant 17 : index
    %309 = memref.load %arg1[%c17] : memref<85xf32, #tpu.memory_space<smem>>
    %310 = vector.broadcast %309 : f32 to vector<1x8xf32>
    %311 = arith.addf %310, %308 : vector<1x8xf32>
    %312 = arith.mulf %311, %293 : vector<1x8xf32>
    %313 = arith.addf %292, %312 : vector<1x8xf32>
    %314 = arith.mulf %4, %3 : vector<1x8xf32>
    %c34 = arith.constant 34 : index
    %315 = memref.load %arg1[%c34] : memref<85xf32, #tpu.memory_space<smem>>
    %316 = vector.broadcast %315 : f32 to vector<1x8xf32>
    %317 = arith.mulf %316, %1 : vector<1x8xf32>
    %c50 = arith.constant 50 : index
    %318 = memref.load %arg1[%c50] : memref<85xf32, #tpu.memory_space<smem>>
    %319 = vector.broadcast %318 : f32 to vector<1x8xf32>
    %320 = arith.mulf %319, %2 : vector<1x8xf32>
    %321 = arith.addf %317, %320 : vector<1x8xf32>
    %c66 = arith.constant 66 : index
    %322 = memref.load %arg1[%c66] : memref<85xf32, #tpu.memory_space<smem>>
    %323 = vector.broadcast %322 : f32 to vector<1x8xf32>
    %324 = arith.mulf %323, %3 : vector<1x8xf32>
    %325 = arith.addf %321, %324 : vector<1x8xf32>
    %c82 = arith.constant 82 : index
    %326 = memref.load %arg1[%c82] : memref<85xf32, #tpu.memory_space<smem>>
    %327 = vector.broadcast %326 : f32 to vector<1x8xf32>
    %328 = arith.mulf %327, %4 : vector<1x8xf32>
    %329 = arith.addf %325, %328 : vector<1x8xf32>
    %c18 = arith.constant 18 : index
    %330 = memref.load %arg1[%c18] : memref<85xf32, #tpu.memory_space<smem>>
    %331 = vector.broadcast %330 : f32 to vector<1x8xf32>
    %332 = arith.addf %331, %329 : vector<1x8xf32>
    %333 = arith.mulf %332, %314 : vector<1x8xf32>
    %334 = arith.addf %313, %333 : vector<1x8xf32>
    %335 = arith.mulf %4, %4 : vector<1x8xf32>
    %c35 = arith.constant 35 : index
    %336 = memref.load %arg1[%c35] : memref<85xf32, #tpu.memory_space<smem>>
    %337 = vector.broadcast %336 : f32 to vector<1x8xf32>
    %338 = arith.mulf %337, %1 : vector<1x8xf32>
    %c51 = arith.constant 51 : index
    %339 = memref.load %arg1[%c51] : memref<85xf32, #tpu.memory_space<smem>>
    %340 = vector.broadcast %339 : f32 to vector<1x8xf32>
    %341 = arith.mulf %340, %2 : vector<1x8xf32>
    %342 = arith.addf %338, %341 : vector<1x8xf32>
    %c67 = arith.constant 67 : index
    %343 = memref.load %arg1[%c67] : memref<85xf32, #tpu.memory_space<smem>>
    %344 = vector.broadcast %343 : f32 to vector<1x8xf32>
    %345 = arith.mulf %344, %3 : vector<1x8xf32>
    %346 = arith.addf %342, %345 : vector<1x8xf32>
    %c83 = arith.constant 83 : index
    %347 = memref.load %arg1[%c83] : memref<85xf32, #tpu.memory_space<smem>>
    %348 = vector.broadcast %347 : f32 to vector<1x8xf32>
    %349 = arith.mulf %348, %4 : vector<1x8xf32>
    %350 = arith.addf %346, %349 : vector<1x8xf32>
    %c19 = arith.constant 19 : index
    %351 = memref.load %arg1[%c19] : memref<85xf32, #tpu.memory_space<smem>>
    %352 = vector.broadcast %351 : f32 to vector<1x8xf32>
    %353 = arith.addf %352, %350 : vector<1x8xf32>
    %354 = arith.mulf %353, %335 : vector<1x8xf32>
    %355 = arith.addf %334, %354 : vector<1x8xf32>
    %c84 = arith.constant 84 : index
    %356 = memref.load %arg1[%c84] : memref<85xf32, #tpu.memory_space<smem>>
    %357 = vector.broadcast %356 : f32 to vector<1x8xf32>
    %358 = arith.addf %355, %357 : vector<1x8xf32>
    %c0_2 = arith.constant 0 : index
    %c0_3 = arith.constant 0 : index
    %359 = vector.load %arg3[%c0_2, %c0_3] : memref<1x8xf32, #tpu.memory_space<vmem>>, vector<1x8xf32>
    tpu.vector_store %arg3[%c0_2, %c0_3], %358 {strides = array<i32>} : memref<1x8xf32, #tpu.memory_space<vmem>>, vector<1x8xf32>,
    return
  }
  func.func @transform_0(%arg0: i32) -> i32 {
    %c0_i32 = arith.constant 0 : i32
    %c0_i32_0 = arith.constant 0 : i32
    return %c0_i32 : i32
  }
  func.func @transform_1(%arg0: i32) -> (i32, i32) {
    %c0_i32 = arith.constant 0 : i32
    %c0_i32_0 = arith.constant 0 : i32
    return %c0_i32, %arg0 : i32, i32
  }
  func.func @transform_2(%arg0: i32) -> (i32, i32) {
    %c0_i32 = arith.constant 0 : i32
    %c0_i32_0 = arith.constant 0 : i32
    return %c0_i32, %arg0 : i32, i32
  }
}

</mosaic_0001>

<llo_original>
// kernel: tpu_custom_call.1
$region0: #{tpu_custom_call.1}
  #allocation0 [shape = 'u32[]', space=smem, size = 0x4, offset = 0x4, fixed_abs, tag = 'smem constant byte address 0x4 - core index']
  #allocation1 [shape = 'u32[144,128]{1,0:T(1,128)}', space=vmem, size = 0x12000, scoped, tag = 'internal scratch']
  %s0 = inlined_call_operand.hbm [shape: f32[85], index: 0, kind: input, shape index: {}]
  %s1 = inlined_call_operand.hbm [shape: f32[4,8], index: 1, kind: input, shape index: {}]
  %s2 = inlined_call_operand.hbm [shape: f32[1,8], index: 2, kind: output, shape index: {}]
  %s3 = sld [smem:[#allocation0]]
  $region26: #{tpu_custom_call.1} parent=0
    _
  %s5 = ssub.s32 1, %s3
  %s6 = scalar_select 0, %s5, %s3
  $region1: #{tpu_custom_call.1} parent=0
    #allocation2 [shape = 'u8[512]{0}', space=smem, size = 0x200, scoped, tag = 'input window, operand 0, single buffered']
    #allocation3 [shape = 's32[1]{0}', space=sflag, size = 0x4, scoped, tag = 'scoped memory for tpu_custom_call.1']
    #allocation4 [shape = 's32[1]{0}', space=sflag, size = 0x4, scoped, tag = 'scoped memory for tpu_custom_call.1']
    #allocation5 [shape = 's32[1]{0}', space=sflag, size = 0x4, scoped, tag = 'scoped memory for tpu_custom_call.1']
    #allocation6 [shape = 'u8[2048]{0}', space=vmem, size = 0x800, scoped, tag = 'input window, operand 1, single buffered']
    #allocation7 [shape = 'u8[512]{0}', space=vmem, size = 0x400, scoped, tag = 'output window, operand 0, single buffered']
    %7 = vsyncpa [#allocation5], 0
    %8 = vsyncpa [#allocation3], 0
    %9 = vsyncpa [#allocation4], 0
    // Predicated region
    $region2: #{tpu_custom_call.1} parent=1 // pred_check
      _
    $region3: #{tpu_custom_call.1} parent=1 // pred_check_branch
      %11 = sbr.rel (0) target = $region5
    $region4: #{tpu_custom_call.1} parent=1 // pred_region
      %s13 = ssub.s32 16, 16
      %14 = vsyncadd [#allocation5], %s13
      %17 = dma.hbm_to_smem %s0, 16, [#allocation2], [#allocation5]
    $region5: #{tpu_custom_call.1} parent=1 // pred_fallthru
      _
    // Predicated region
    $region6: #{tpu_custom_call.1} parent=1 // pred_check
      _
    $region7: #{tpu_custom_call.1} parent=1 // pred_check_branch
      %19 = sbr.rel (0) target = $region9
    $region8: #{tpu_custom_call.1} parent=1 // pred_region
      %s21 = ssub.s32 64, 64
      %22 = vsyncadd [#allocation3], %s21
      %s24 = sshll.u32 [#allocation6], 4
      %s25 = int_to_ptr.vmem [resolvable:$true] %s24
      %27 = dma.hbm_to_vmem [thread:$0]  %s1, 64, %s25, [#allocation3]
    $region9: #{tpu_custom_call.1} parent=1 // pred_fallthru
      _
    // Predicated region
    $region10: #{tpu_custom_call.1} parent=1 // pred_check
      _
    $region11: #{tpu_custom_call.1} parent=1 // pred_check_branch
      %29 = sbr.rel (0) target = $region13
    $region12: #{tpu_custom_call.1} parent=1 // pred_region
      %30 = dma.done [#allocation5], 16
    $region13: #{tpu_custom_call.1} parent=1 // pred_fallthru
      _
    // Predicated region
    $region14: #{tpu_custom_call.1} parent=1 // pred_check
      _
    $region15: #{tpu_custom_call.1} parent=1 // pred_check_branch
      %32 = sbr.rel (0) target = $region17
    $region16: #{tpu_custom_call.1} parent=1 // pred_region
      %33 = dma.done [#allocation3], 64
    $region17: #{tpu_custom_call.1} parent=1 // pred_fallthru
      _
    %34 = sfence
    %v35 = vld [vmem:[#allocation6] sm:$0xf]
    %s36 = sld [smem:[#allocation2]]
    %v37 = vstv %s36
    %v38 = vmul.f32 %v37, %v35
    %s39 = sld [smem:[#allocation2 + $0x1]]
    %v40 = vstv %s39
    %v41 = vmul.f32 %v40, %v35
    %v43 = vrot.slane %v41, 1
    %v45 = vadd.f32 %v38, %v43
    %s46 = sld [smem:[#allocation2 + $0x2]]
    %v47 = vstv %s46
    %v48 = vmul.f32 %v47, %v35
    %v50 = vrot.slane %v48, 2
    %v52 = vadd.f32 %v45, %v50
    %s53 = sld [smem:[#allocation2 + $0x3]]
    %v54 = vstv %s53
    %v55 = vmul.f32 %v54, %v35
    %v57 = vrot.slane %v55, 3
    %v59 = vadd.f32 %v52, %v57
    %v60 = vmul.f32 %v35, %v35
    %s61 = sld [smem:[#allocation2 + $0x14]]
    %v62 = vstv %s61
    %v63 = vmul.f32 %v62, %v35
    %s64 = sld [smem:[#allocation2 + $0x24]]
    %v65 = vstv %s64
    %v66 = vmul.f32 %v65, %v35
    %v68 = vrot.slane %v66, 1
    %v70 = vadd.f32 %v63, %v68
    %s71 = sld [smem:[#allocation2 + $0x34]]
    %v72 = vstv %s71
    %v73 = vmul.f32 %v72, %v35
    %v75 = vrot.slane %v73, 2
    %v77 = vadd.f32 %v70, %v75
    %s78 = sld [smem:[#allocation2 + $0x44]]
    %v79 = vstv %s78
    %v80 = vmul.f32 %v79, %v35
    %v82 = vrot.slane %v80, 3
    %v84 = vadd.f32 %v77, %v82
    %s85 = sld [smem:[#allocation2 + $0x4]]
    %v86 = vstv %s85
    %v87 = vadd.f32 %v86, %v84
    %v88 = vmul.f32 %v87, %v60
    %v89 = vadd.f32 %v59, %v88
    %v91 = vrot.slane %v35, 1
    %v93 = vmul.f32 %v35, %v91
    %s94 = sld [smem:[#allocation2 + $0x15]]
    %v95 = vstv %s94
    %v96 = vmul.f32 %v95, %v35
    %s97 = sld [smem:[#allocation2 + $0x25]]
    %v98 = vstv %s97
    %v99 = vmul.f32 %v98, %v35
    %v101 = vrot.slane %v99, 1
    %v103 = vadd.f32 %v96, %v101
    %s104 = sld [smem:[#allocation2 + $0x35]]
    %v105 = vstv %s104
    %v106 = vmul.f32 %v105, %v35
    %v108 = vrot.slane %v106, 2
    %v110 = vadd.f32 %v103, %v108
    %s111 = sld [smem:[#allocation2 + $0x45]]
    %v112 = vstv %s111
    %v113 = vmul.f32 %v112, %v35
    %v115 = vrot.slane %v113, 3
    %v117 = vadd.f32 %v110, %v115
    %s118 = sld [smem:[#allocation2 + $0x5]]
    %v119 = vstv %s118
    %v120 = vadd.f32 %v119, %v117
    %v121 = vmul.f32 %v120, %v93
    %v122 = vadd.f32 %v89, %v121
    %v123 = vrot.slane %v35, 2
    %v125 = vmul.f32 %v35, %v123
    %s126 = sld [smem:[#allocation2 + $0x16]]
    %v127 = vstv %s126
    %v128 = vmul.f32 %v127, %v35
    %s129 = sld [smem:[#allocation2 + $0x26]]
    %v130 = vstv %s129
    %v131 = vmul.f32 %v130, %v35
    %v133 = vrot.slane %v131, 1
    %v135 = vadd.f32 %v128, %v133
    %s136 = sld [smem:[#allocation2 + $0x36]]
    %v137 = vstv %s136
    %v138 = vmul.f32 %v137, %v35
    %v140 = vrot.slane %v138, 2
    %v142 = vadd.f32 %v135, %v140
    %s143 = sld [smem:[#allocation2 + $0x46]]
    %v144 = vstv %s143
    %v145 = vmul.f32 %v144, %v35
    %v147 = vrot.slane %v145, 3
    %v149 = vadd.f32 %v142, %v147
    %s150 = sld [smem:[#allocation2 + $0x6]]
    %v151 = vstv %s150
    %v152 = vadd.f32 %v151, %v149
    %v153 = vmul.f32 %v152, %v125
    %v154 = vadd.f32 %v122, %v153
    %v155 = vrot.slane %v35, 3
    %v157 = vmul.f32 %v35, %v155
    %s158 = sld [smem:[#allocation2 + $0x17]]
    %v159 = vstv %s158
    %v160 = vmul.f32 %v159, %v35
    %s161 = sld [smem:[#allocation2 + $0x27]]
    %v162 = vstv %s161
    %v163 = vmul.f32 %v162, %v35
    %v165 = vrot.slane %v163, 1
    %v167 = vadd.f32 %v160, %v165
    %s168 = sld [smem:[#allocation2 + $0x37]]
    %v169 = vstv %s168
    %v170 = vmul.f32 %v169, %v35
    %v172 = vrot.slane %v170, 2
    %v174 = vadd.f32 %v167, %v172
    %s175 = sld [smem:[#allocation2 + $0x47]]
    %v176 = vstv %s175
    %v177 = vmul.f32 %v176, %v35
    %v179 = vrot.slane %v177, 3
    %v181 = vadd.f32 %v174, %v179
    %s182 = sld [smem:[#allocation2 + $0x7]]
    %v183 = vstv %s182
    %v184 = vadd.f32 %v183, %v181
    %v185 = vmul.f32 %v184, %v157
    %v186 = vadd.f32 %v154, %v185
    %s187 = sld [smem:[#allocation2 + $0x18]]
    %v188 = vstv %s187
    %v189 = vmul.f32 %v188, %v35
    %s190 = sld [smem:[#allocation2 + $0x28]]
    %v191 = vstv %s190
    %v192 = vmul.f32 %v191, %v35
    %v194 = vrot.slane %v192, 1
    %v196 = vadd.f32 %v189, %v194
    %s197 = sld [smem:[#allocation2 + $0x38]]
    %v198 = vstv %s197
    %v199 = vmul.f32 %v198, %v35
    %v201 = vrot.slane %v199, 2
    %v203 = vadd.f32 %v196, %v201
    %s204 = sld [smem:[#allocation2 + $0x48]]
    %v205 = vstv %s204
    %v206 = vmul.f32 %v205, %v35
    %v208 = vrot.slane %v206, 3
    %v210 = vadd.f32 %v203, %v208
    %s211 = sld [smem:[#allocation2 + $0x8]]
    %v212 = vstv %s211
    %v213 = vadd.f32 %v212, %v210
    %v214 = vmul.f32 %v213, %v93
    %v215 = vadd.f32 %v186, %v214
    %s216 = sld [smem:[#allocation2 + $0x19]]
    %v217 = vstv %s216
    %v218 = vmul.f32 %v217, %v35
    %s219 = sld [smem:[#allocation2 + $0x29]]
    %v220 = vstv %s219
    %v221 = vmul.f32 %v220, %v35
    %v223 = vrot.slane %v221, 1
    %v225 = vadd.f32 %v218, %v223
    %s226 = sld [smem:[#allocation2 + $0x39]]
    %v227 = vstv %s226
    %v228 = vmul.f32 %v227, %v35
    %v230 = vrot.slane %v228, 2
    %v232 = vadd.f32 %v225, %v230
    %s233 = sld [smem:[#allocation2 + $0x49]]
    %v234 = vstv %s233
    %v235 = vmul.f32 %v234, %v35
    %v237 = vrot.slane %v235, 3
    %v239 = vadd.f32 %v232, %v237
    %s240 = sld [smem:[#allocation2 + $0x9]]
    %v241 = vstv %s240
    %v242 = vadd.f32 %v241, %v239
    %v244 = vrot.slane %v60, 1
    %v246 = vmul.f32 %v242, %v244
    %v247 = vadd.f32 %v215, %v246
    %s248 = sld [smem:[#allocation2 + $0x1a]]
    %v249 = vstv %s248
    %v250 = vmul.f32 %v249, %v35
    %s251 = sld [smem:[#allocation2 + $0x2a]]
    %v252 = vstv %s251
    %v253 = vmul.f32 %v252, %v35
    %v255 = vrot.slane %v253, 1
    %v257 = vadd.f32 %v250, %v255
    %s258 = sld [smem:[#allocation2 + $0x3a]]
    %v259 = vstv %s258
    %v260 = vmul.f32 %v259, %v35
    %v262 = vrot.slane %v260, 2
    %v264 = vadd.f32 %v257, %v262
    %s265 = sld [smem:[#allocation2 + $0x4a]]
    %v266 = vstv %s265
    %v267 = vmul.f32 %v266, %v35
    %v269 = vrot.slane %v267, 3
    %v271 = vadd.f32 %v264, %v269
    %s272 = sld [smem:[#allocation2 + $0xa]]
    %v273 = vstv %s272
    %v274 = vadd.f32 %v273, %v271
    %v276 = vrot.slane %v93, 1
    %v278 = vmul.f32 %v274, %v276
    %v279 = vadd.f32 %v247, %v278
    %s280 = sld [smem:[#allocation2 + $0x1b]]
    %v281 = vstv %s280
    %v282 = vmul.f32 %v281, %v35
    %s283 = sld [smem:[#allocation2 + $0x2b]]
    %v284 = vstv %s283
    %v285 = vmul.f32 %v284, %v35
    %v287 = vrot.slane %v285, 1
    %v289 = vadd.f32 %v282, %v287
    %s290 = sld [smem:[#allocation2 + $0x3b]]
    %v291 = vstv %s290
    %v292 = vmul.f32 %v291, %v35
    %v294 = vrot.slane %v292, 2
    %v296 = vadd.f32 %v289, %v294
    %s297 = sld [smem:[#allocation2 + $0x4b]]
    %v298 = vstv %s297
    %v299 = vmul.f32 %v298, %v35
    %v301 = vrot.slane %v299, 3
    %v303 = vadd.f32 %v296, %v301
    %s304 = sld [smem:[#allocation2 + $0xb]]
    %v305 = vstv %s304
    %v306 = vadd.f32 %v305, %v303
    %v308 = vrot.slane %v125, 1
    %v310 = vmul.f32 %v306, %v308
    %v311 = vadd.f32 %v279, %v310
    %s312 = sld [smem:[#allocation2 + $0x1c]]
    %v313 = vstv %s312
    %v314 = vmul.f32 %v313, %v35
    %s315 = sld [smem:[#allocation2 + $0x2c]]
    %v316 = vstv %s315
    %v317 = vmul.f32 %v316, %v35
    %v319 = vrot.slane %v317, 1
    %v321 = vadd.f32 %v314, %v319
    %s322 = sld [smem:[#allocation2 + $0x3c]]
    %v323 = vstv %s322
    %v324 = vmul.f32 %v323, %v35
    %v326 = vrot.slane %v324, 2
    %v328 = vadd.f32 %v321, %v326
    %s329 = sld [smem:[#allocation2 + $0x4c]]
    %v330 = vstv %s329
    %v331 = vmul.f32 %v330, %v35
    %v333 = vrot.slane %v331, 3
    %v335 = vadd.f32 %v328, %v333
    %s336 = sld [smem:[#allocation2 + $0xc]]
    %v337 = vstv %s336
    %v338 = vadd.f32 %v337, %v335
    %v339 = vmul.f32 %v338, %v125
    %v340 = vadd.f32 %v311, %v339
    %s341 = sld [smem:[#allocation2 + $0x1d]]
    %v342 = vstv %s341
    %v343 = vmul.f32 %v342, %v35
    %s344 = sld [smem:[#allocation2 + $0x2d]]
    %v345 = vstv %s344
    %v346 = vmul.f32 %v345, %v35
    %v348 = vrot.slane %v346, 1
    %v350 = vadd.f32 %v343, %v348
    %s351 = sld [smem:[#allocation2 + $0x3d]]
    %v352 = vstv %s351
    %v353 = vmul.f32 %v352, %v35
    %v355 = vrot.slane %v353, 2
    %v357 = vadd.f32 %v350, %v355
    %s358 = sld [smem:[#allocation2 + $0x4d]]
    %v359 = vstv %s358
    %v360 = vmul.f32 %v359, %v35
    %v362 = vrot.slane %v360, 3
    %v364 = vadd.f32 %v357, %v362
    %s365 = sld [smem:[#allocation2 + $0xd]]
    %v366 = vstv %s365
    %v367 = vadd.f32 %v366, %v364
    %v368 = vmul.f32 %v367, %v276
    %v369 = vadd.f32 %v340, %v368
    %s370 = sld [smem:[#allocation2 + $0x1e]]
    %v371 = vstv %s370
    %v372 = vmul.f32 %v371, %v35
    %s373 = sld [smem:[#allocation2 + $0x2e]]
    %v374 = vstv %s373
    %v375 = vmul.f32 %v374, %v35
    %v377 = vrot.slane %v375, 1
    %v379 = vadd.f32 %v372, %v377
    %s380 = sld [smem:[#allocation2 + $0x3e]]
    %v381 = vstv %s380
    %v382 = vmul.f32 %v381, %v35
    %v384 = vrot.slane %v382, 2
    %v386 = vadd.f32 %v379, %v384
    %s387 = sld [smem:[#allocation2 + $0x4e]]
    %v388 = vstv %s387
    %v389 = vmul.f32 %v388, %v35
    %v391 = vrot.slane %v389, 3
    %v393 = vadd.f32 %v386, %v391
    %s394 = sld [smem:[#allocation2 + $0xe]]
    %v395 = vstv %s394
    %v396 = vadd.f32 %v395, %v393
    %v397 = vrot.slane %v60, 2
    %v399 = vmul.f32 %v396, %v397
    %v400 = vadd.f32 %v369, %v399
    %s401 = sld [smem:[#allocation2 + $0x1f]]
    %v402 = vstv %s401
    %v403 = vmul.f32 %v402, %v35
    %s404 = sld [smem:[#allocation2 + $0x2f]]
    %v405 = vstv %s404
    %v406 = vmul.f32 %v405, %v35
    %v408 = vrot.slane %v406, 1
    %v410 = vadd.f32 %v403, %v408
    %s411 = sld [smem:[#allocation2 + $0x3f]]
    %v412 = vstv %s411
    %v413 = vmul.f32 %v412, %v35
    %v415 = vrot.slane %v413, 2
    %v417 = vadd.f32 %v410, %v415
    %s418 = sld [smem:[#allocation2 + $0x4f]]
    %v419 = vstv %s418
    %v420 = vmul.f32 %v419, %v35
    %v422 = vrot.slane %v420, 3
    %v424 = vadd.f32 %v417, %v422
    %s425 = sld [smem:[#allocation2 + $0xf]]
    %v426 = vstv %s425
    %v427 = vadd.f32 %v426, %v424
    %v428 = vrot.slane %v93, 2
    %v430 = vmul.f32 %v427, %v428
    %v431 = vadd.f32 %v400, %v430
    %s432 = sld [smem:[#allocation2 + $0x20]]
    %v433 = vstv %s432
    %v434 = vmul.f32 %v433, %v35
    %s435 = sld [smem:[#allocation2 + $0x30]]
    %v436 = vstv %s435
    %v437 = vmul.f32 %v436, %v35
    %v439 = vrot.slane %v437, 1
    %v441 = vadd.f32 %v434, %v439
    %s442 = sld [smem:[#allocation2 + $0x40]]
    %v443 = vstv %s442
    %v444 = vmul.f32 %v443, %v35
    %v446 = vrot.slane %v444, 2
    %v448 = vadd.f32 %v441, %v446
    %s449 = sld [smem:[#allocation2 + $0x50]]
    %v450 = vstv %s449
    %v451 = vmul.f32 %v450, %v35
    %v453 = vrot.slane %v451, 3
    %v455 = vadd.f32 %v448, %v453
    %s456 = sld [smem:[#allocation2 + $0x10]]
    %v457 = vstv %s456
    %v458 = vadd.f32 %v457, %v455
    %v459 = vmul.f32 %v458, %v157
    %v460 = vadd.f32 %v431, %v459
    %s461 = sld [smem:[#allocation2 + $0x21]]
    %v462 = vstv %s461
    %v463 = vmul.f32 %v462, %v35
    %s464 = sld [smem:[#allocation2 + $0x31]]
    %v465 = vstv %s464
    %v466 = vmul.f32 %v465, %v35
    %v468 = vrot.slane %v466, 1
    %v470 = vadd.f32 %v463, %v468
    %s471 = sld [smem:[#allocation2 + $0x41]]
    %v472 = vstv %s471
    %v473 = vmul.f32 %v472, %v35
    %v475 = vrot.slane %v473, 2
    %v477 = vadd.f32 %v470, %v475
    %s478 = sld [smem:[#allocation2 + $0x51]]
    %v479 = vstv %s478
    %v480 = vmul.f32 %v479, %v35
    %v482 = vrot.slane %v480, 3
    %v484 = vadd.f32 %v477, %v482
    %s485 = sld [smem:[#allocation2 + $0x11]]
    %v486 = vstv %s485
    %v487 = vadd.f32 %v486, %v484
    %v488 = vmul.f32 %v487, %v308
    %v489 = vadd.f32 %v460, %v488
    %s490 = sld [smem:[#allocation2 + $0x22]]
    %v491 = vstv %s490
    %v492 = vmul.f32 %v491, %v35
    %s493 = sld [smem:[#allocation2 + $0x32]]
    %v494 = vstv %s493
    %v495 = vmul.f32 %v494, %v35
    %v497 = vrot.slane %v495, 1
    %v499 = vadd.f32 %v492, %v497
    %s500 = sld [smem:[#allocation2 + $0x42]]
    %v501 = vstv %s500
    %v502 = vmul.f32 %v501, %v35
    %v504 = vrot.slane %v502, 2
    %v506 = vadd.f32 %v499, %v504
    %s507 = sld [smem:[#allocation2 + $0x52]]
    %v508 = vstv %s507
    %v509 = vmul.f32 %v508, %v35
    %v511 = vrot.slane %v509, 3
    %v513 = vadd.f32 %v506, %v511
    %s514 = sld [smem:[#allocation2 + $0x12]]
    %v515 = vstv %s514
    %v516 = vadd.f32 %v515, %v513
    %v517 = vmul.f32 %v516, %v428
    %v518 = vadd.f32 %v489, %v517
    %s519 = sld [smem:[#allocation2 + $0x23]]
    %v520 = vstv %s519
    %v521 = vmul.f32 %v520, %v35
    %s522 = sld [smem:[#allocation2 + $0x33]]
    %v523 = vstv %s522
    %v524 = vmul.f32 %v523, %v35
    %v526 = vrot.slane %v524, 1
    %v528 = vadd.f32 %v521, %v526
    %s529 = sld [smem:[#allocation2 + $0x43]]
    %v530 = vstv %s529
    %v531 = vmul.f32 %v530, %v35
    %v533 = vrot.slane %v531, 2
    %v535 = vadd.f32 %v528, %v533
    %s536 = sld [smem:[#allocation2 + $0x53]]
    %v537 = vstv %s536
    %v538 = vmul.f32 %v537, %v35
    %v540 = vrot.slane %v538, 3
    %v542 = vadd.f32 %v535, %v540
    %s543 = sld [smem:[#allocation2 + $0x13]]
    %v544 = vstv %s543
    %v545 = vadd.f32 %v544, %v542
    %v546 = vrot.slane %v60, 3
    %v548 = vmul.f32 %v545, %v546
    %v549 = vadd.f32 %v518, %v548
    %s550 = sld [smem:[#allocation2 + $0x54]]
    %v551 = vstv %s550
    %v552 = vadd.f32 %v549, %v551
    %vm553 = vcmask 57344
    %554 = vst.msk [vmem:[#allocation7] sm:$0x1] %vm553, %v552
    // Predicated region
    $region18: #{tpu_custom_call.1} parent=1 // pred_check
      _
    $region19: #{tpu_custom_call.1} parent=1 // pred_check_branch
      %556 = sbr.rel (0) target = $region21
    $region20: #{tpu_custom_call.1} parent=1 // pred_region
      %s558 = ssub.s32 16, 16
      %559 = vsyncadd [#allocation4], %s558
      %s561 = sshll.u32 [#allocation7], 4
      %s562 = int_to_ptr.vmem [resolvable:$true] %s561
      %564 = dma.vmem_to_hbm [thread:$0]  %s562, 16, %s2, [#allocation4]
    $region21: #{tpu_custom_call.1} parent=1 // pred_fallthru
      _
    // Predicated region
    $region22: #{tpu_custom_call.1} parent=1 // pred_check
      _
    $region23: #{tpu_custom_call.1} parent=1 // pred_check_branch
      %566 = sbr.rel (0) target = $region25
    $region24: #{tpu_custom_call.1} parent=1 // pred_region
      %567 = dma.done [#allocation4], 16
    $region25: #{tpu_custom_call.1} parent=1 // pred_fallthru
      _
    %568 = vsyncpa [#allocation3], 1
    %569 = vsyncpa [#allocation4], 1
    %570 = vsyncpa [#allocation5], 1

</llo_original>
